<compile_context>
chip_gen: v7x
topology: tpu7x:2x2x1
jax: 0.10.0
libtpu: 0.0.40
codegen_flags: <defaults>
</compile_context>

<pallas_src>
import math

import jax
import jax.numpy as jnp
from jax.experimental import pallas as pl
from jax.experimental.pallas import tpu as pltpu

_LANE = 128
_MAX_ROWS_PER_BLOCK = 2048  # 2048 * 128 * 4 B = 1 MiB per f32 operand block


def _mixup_kernel(perm_ref, lam_ref, x_ref, xp_ref, o_ref):
    # perm_ref : SMEM int32 (B,)     -- scalar prefetch, used only by index_maps
    # lam_ref  : SMEM float32 (1,)   -- mixing coefficient
    # x_ref    : VMEM (1, TR, 128)   -- tile of x[i]
    # xp_ref   : VMEM (1, TR, 128)   -- tile of x[perm[i]]
    # o_ref    : VMEM (1, TR, 128)
    lam = lam_ref[0]
    x = x_ref[...].astype(jnp.float32)
    xp = xp_ref[...].astype(jnp.float32)
    # o = lam*x + (1-lam)*xp, rewritten as a single FMA-style expression.
    o_ref[...] = (xp + lam * (x - xp)).astype(o_ref.dtype)


def mixup_pallas(x, y, perm, lam):
    """x: (B, C, H, W), y: (B,) int32, perm: (B,) int32, lam: scalar f32.

    Returns (x_mixed, (y_a, y_b)) matching MixUp.forward semantics.
    """
    orig_shape = x.shape
    B = x.shape[0]
    F = math.prod(x.shape[1:])
    lam_arr = jnp.asarray(lam, jnp.float32).reshape((1,))
    perm = perm.astype(jnp.int32)

    # Lane-dense flatten: (B, C, H, W) -> (B, R, 128). Pad the feature axis to
    # a multiple of 128 if necessary (no-op for the common C*H*W case).
    Fp = ((F + _LANE - 1) // _LANE) * _LANE
    xf = x.reshape(B, F)
    if Fp != F:
        xf = jnp.pad(xf, ((0, 0), (0, Fp - F)))
    R = Fp // _LANE
    xf = xf.reshape(B, R, _LANE)

    # Sublane tile: multiple of 8 (or the full axis when it is short), capped
    # so one operand block stays ~<=1 MiB. With 3 operands double-buffered
    # that is <= ~6 MiB of scoped VMEM -> fits default limits on v5e/v6e/v7x.
    if R <= 8:
        tr = R
    else:
        tr = max(8, (min(R, _MAX_ROWS_PER_BLOCK) // 8) * 8)
    num_tiles = pl.cdiv(R, tr)

    grid_spec = pltpu.PrefetchScalarGridSpec(
        num_scalar_prefetch=1,            # perm -> SMEM, visible to index_maps
        grid=(B, num_tiles),
        in_specs=[
            # lam scalar, untiled, in SMEM
            pl.BlockSpec(memory_space=pltpu.MemorySpace.SMEM),
            # x[i], feature tile t
            pl.BlockSpec((1, tr, _LANE), lambda i, t, perm_ref: (i, t, 0)),
            # x[perm[i]], feature tile t : data-dependent batch gather
            pl.BlockSpec((1, tr, _LANE),
                         lambda i, t, perm_ref: (perm_ref[i], t, 0)),
        ],
        out_specs=pl.BlockSpec((1, tr, _LANE),
                               lambda i, t, perm_ref: (i, t, 0)),
    )

    out = pl.pallas_call(
        _mixup_kernel,
        out_shape=jax.ShapeDtypeStruct((B, R, _LANE), x.dtype),
        grid_spec=grid_spec,
        compiler_params=pltpu.CompilerParams(
            dimension_semantics=("parallel", "parallel"),
            vmem_limit_bytes=32 * 1024 * 1024,
        ),
        cost_estimate=pl.CostEstimate(
            flops=3 * x.size,
            transcendentals=0,
            bytes_accessed=3 * x.size * x.dtype.itemsize,
        ),
    )(perm, lam_arr, xf, xf)

    x_mixed = out.reshape(B, Fp)[:, :F].reshape(orig_shape)

    # Label bookkeeping is pure glue (tiny gather), kept in plain JAX.
    y_a = y
    y_b = jnp.take(y, perm, axis=0)
    return x_mixed, (y_a, y_b)


if __name__ == "__main__":
    key = jax.random.PRNGKey(0)
    k_x, k_y, k_perm, k_lam = jax.random.split(key, 4)

    B, C, H, W = 2, 4, 16, 16
    alpha = 0.3

    x = jax.random.normal(k_x, (B, C, H, W), dtype=jnp.float32)
    y = jax.random.randint(k_y, (B,), 0, 10, dtype=jnp.int32)

    # Deterministic replacements for np.random.beta / torch.randperm:
    lam = jax.random.beta(k_lam, alpha, alpha)
    perm = jax.random.permutation(k_perm, B).astype(jnp.int32)

    x_mixed, (y_a, y_b) = mixup_pallas(x, y, perm, lam)
    jax.block_until_ready((x_mixed, y_a, y_b))

    # Reference check in plain JAX.
    ref = lam * x + (1.0 - lam) * x[perm]
    assert jnp.allclose(x_mixed, ref, atol=1e-5, rtol=1e-5), "mismatch vs reference"
    assert jnp.array_equal(y_a, y)
    assert jnp.array_equal(y_b, y[perm])

    print("KERNEL_OK")
</pallas_src>

<mosaic_0001>
module attributes {stable_mosaic.version = 11 : i64} {
  func.func @_mixup_kernel(%arg0: i32, %arg1: i32, %arg2: memref<2xi32, #tpu.memory_space<smem>>, %arg3: memref<1xf32, #tpu.memory_space<smem>>, %arg4: memref<1x8x128xf32, #tpu.memory_space<vmem>>, %arg5: memref<1x8x128xf32, #tpu.memory_space<vmem>>, %arg6: memref<1x8x128xf32, #tpu.memory_space<vmem>>) attributes {dimension_semantics = [#tpu.dimension_semantics<parallel>, #tpu.dimension_semantics<parallel>], iteration_bounds = array<i64: 2, 1>, scalar_prefetch = 1 : i64, scratch_operands = 0 : i64, tpu.core_type = #tpu.core_type<tc>, window_params = [{transform_indices = @transform_0, window_bounds = array<i64: 1>}, {transform_indices = @transform_1, window_bounds = array<i64: 1, 8, 128>}, {transform_indices = @transform_2, window_bounds = array<i64: 1, 8, 128>}, {transform_indices = @transform_3, window_bounds = array<i64: 1, 8, 128>}]} {
    %c0 = arith.constant 0 : index
    %0 = memref.load %arg3[%c0] : memref<1xf32, #tpu.memory_space<smem>>
    %c0_0 = arith.constant 0 : index
    %c0_1 = arith.constant 0 : index
    %c0_2 = arith.constant 0 : index
    %1 = vector.load %arg4[%c0_0, %c0_1, %c0_2] : memref<1x8x128xf32, #tpu.memory_space<vmem>>, vector<1x8x128xf32>
    %c0_3 = arith.constant 0 : index
    %c0_4 = arith.constant 0 : index
    %c0_5 = arith.constant 0 : index
    %2 = vector.load %arg5[%c0_3, %c0_4, %c0_5] : memref<1x8x128xf32, #tpu.memory_space<vmem>>, vector<1x8x128xf32>
    %3 = arith.subf %1, %2 : vector<1x8x128xf32>
    %4 = vector.broadcast %0 : f32 to vector<1x8x128xf32>
    %5 = arith.mulf %4, %3 : vector<1x8x128xf32>
    %6 = arith.addf %2, %5 : vector<1x8x128xf32>
    %c0_6 = arith.constant 0 : index
    %c0_7 = arith.constant 0 : index
    %c0_8 = arith.constant 0 : index
    %7 = vector.load %arg6[%c0_6, %c0_7, %c0_8] : memref<1x8x128xf32, #tpu.memory_space<vmem>>, vector<1x8x128xf32>
    tpu.vector_store %arg6[%c0_6, %c0_7, %c0_8], %6 {strides = array<i32>} : memref<1x8x128xf32, #tpu.memory_space<vmem>>, vector<1x8x128xf32>,
    return
  }
  func.func @transform_0(%arg0: i32, %arg1: i32, %arg2: memref<2xi32, #tpu.memory_space<smem>>) -> i32 {
    %c0_i32 = arith.constant 0 : i32
    %c0_i32_0 = arith.constant 0 : i32
    return %c0_i32 : i32
  }
  func.func @transform_1(%arg0: i32, %arg1: i32, %arg2: memref<2xi32, #tpu.memory_space<smem>>) -> (i32, i32, i32) {
    %c0_i32 = arith.constant 0 : i32
    %c0_i32_0 = arith.constant 0 : i32
    return %arg0, %arg1, %c0_i32 : i32, i32, i32
  }
  func.func @transform_2(%arg0: i32, %arg1: i32, %arg2: memref<2xi32, #tpu.memory_space<smem>>) -> (i32, i32, i32) {
    %0 = arith.index_cast %arg0 : i32 to index
    %1 = memref.load %arg2[%0] : memref<2xi32, #tpu.memory_space<smem>>
    %c0_i32 = arith.constant 0 : i32
    %c0_i32_0 = arith.constant 0 : i32
    return %1, %arg1, %c0_i32 : i32, i32, i32
  }
  func.func @transform_3(%arg0: i32, %arg1: i32, %arg2: memref<2xi32, #tpu.memory_space<smem>>) -> (i32, i32, i32) {
    %c0_i32 = arith.constant 0 : i32
    %c0_i32_0 = arith.constant 0 : i32
    return %arg0, %arg1, %c0_i32 : i32, i32, i32
  }
}

</mosaic_0001>

<llo_original>
// kernel: tpu_custom_call.1
$region0: #{tpu_custom_call.1}
  #allocation0 [shape = 'u32[]', space=smem, size = 0x4, offset = 0x4, fixed_abs, tag = 'smem constant byte address 0x4 - core index']
  #allocation1 [shape = 'u32[144,128]{1,0:T(1,128)}', space=vmem, size = 0x12000, scoped, tag = 'internal scratch']
  #allocation2 [shape = 's32[1]{0}', space=sflag, size = 0x4, scoped, tag = 'scoped memory for tpu_custom_call.1']
  #allocation3 [shape = 'u8[512]{0}', space=smem, size = 0x200, scoped, tag = 'prefetched SMEM operand 0']
  #allocation4 [shape = 'f32[1]{0:T(128)S(6)}', space=smem, size = 0x200, scoped, tag = 'scoped memory for tpu_custom_call.1']
  %s0 = inlined_call_operand.vmem [shape: s32[2], index: 0, kind: input, shape index: {}]
  %s1 = inlined_call_operand.<no memory space> [shape: f32[1], index: 1, kind: input, shape index: {}]
  %s2 = inlined_call_operand.hbm [shape: f32[2,8,128], index: 2, kind: input, shape index: {}]
  %s3 = inlined_call_operand.hbm [shape: f32[2,8,128], index: 3, kind: input, shape index: {}]
  %s4 = inlined_call_operand.hbm [shape: f32[2,8,128], index: 4, kind: output, shape index: {}]
  %s5 = sld [smem:[#allocation0]]
  $region53: #{tpu_custom_call.1} parent=0
    _
  %s7 = ssub.s32 1, %s5
  %s8 = scalar_select 0, %s7, %s5
  %s9 = sshll.u32 %s0, 4
  %s10 = int_to_ptr.vmem [resolvable:$true] %s9
  %12 = dma.vmem_to_smem %s10, 16, [#allocation3], [#allocation2]
  %13 = sst [smem:[#allocation4]] %s1
  %14 = dma.done [#allocation2], 16
  %15 = sfence
  $region1: #{tpu_custom_call.1} parent=0
    #allocation5 [shape = 'u8[8192]{0}', space=vmem, size = 0x2000, scoped, tag = 'input window, operand 2']
    #allocation6 [shape = 's32[2]{0}', space=sflag, size = 0x8, scoped, tag = 'scoped memory for tpu_custom_call.1']
    #allocation7 [shape = 's32[2]{0}', space=sflag, size = 0x8, scoped, tag = 'scoped memory for tpu_custom_call.1']
    #allocation8 [shape = 'u8[8192]{0}', space=vmem, size = 0x2000, scoped, tag = 'input window, operand 3']
    #allocation9 [shape = 's32[2]{0}', space=sflag, size = 0x8, scoped, tag = 'scoped memory for tpu_custom_call.1']
    #allocation10 [shape = 'u8[8192]{0}', space=vmem, size = 0x2000, scoped, tag = 'output window, operand 0']
    %16 = vsyncpa [#allocation6], 0
    %s17 = scalar_lea.sflag [#allocation6], 1
    %18 = vsyncpa %s17, 0
    %19 = vsyncpa [#allocation9], 0
    %s20 = scalar_lea.sflag [#allocation9], 1
    %21 = vsyncpa %s20, 0
    %22 = vsyncpa [#allocation7], 0
    %s23 = scalar_lea.sflag [#allocation7], 1
    %24 = vsyncpa %s23, 0
    loop: start=0, step=1, limit=4
    $region2: #{tpu_custom_call.1} parent=1 // loop_pre_header
      _
    $region3: #{tpu_custom_call.1} parent=1 // loop_header
      %s26 = sphi 0, %s30
      %p27 = scmp.ge.s32.totalorder %s26, 4
      %s33 = sphi 0, %s45
      %s34 = sphi 0, %s41
      %s35 = sphi 0, %s33
      %s36 = sphi 0, %s34
      %s37 = sphi 0, %s35
      %s38 = sphi 0, %s36
      %s46 = sphi 0, %s46
      %s48 = sphi 0, %s46
      %s49 = sphi 0, %s48
      %s63 = sphi 0, %s49
      %s71 = sphi 0, %s73
      %s74 = sphi 0, %s71
      %s75 = sphi 0, %s74
      %s91 = sphi 0, %s75
      %s101 = sphi 0, %s103
      %s104 = sphi 0, %s101
      %s105 = sphi 0, %s104
      %s121 = sphi 0, %s105
      %s129 = sphi 0, %s131
      %s132 = sphi 0, %s129
      %s133 = sphi 0, %s132
      %s149 = sphi 0, %s133
    $region4: #{tpu_custom_call.1} parent=1 // loop_header_branch
      %29 = sbr.rel (%p27) target = $region8
    $region5: #{tpu_custom_call.1} parent=1 // loop_body
      %s31 = ssub.s32 %s26, 1
      %s32 = ssub.s32 %s26, 2
      %s39 = sadd.s32 1, %s34
      %p40 = scmp.ge.s32.totalorder %s39, 1
      %s41 = scalar_select %p40, 0, %s39
      %s42 = sadd.s32 1, %s33
      %s43 = scalar_select %p40, %s42, %s33
      %p44 = scmp.ge.s32.totalorder %s43, 2
      %s45 = scalar_select %p44, 0, %s43
      %s47 = sadd.s32 %s46, 1
      %p50 = scmp.eq.s32.totalorder %s26, 1
      %p51 = scmp.ne.s32.totalorder %s46, %s48
      %p52 = scmp.eq.s32.totalorder %s26, 0
      %p53 = por %p51, %p52
      %p54 = scmp.ne.s32.totalorder %s46, %s48
      %p55 = scmp.eq.s32.totalorder %s31, 1
      %p56 = por %p54, %p55
      %p57 = scmp.ne.s32.totalorder %s48, %s49
      %p58 = scmp.eq.s32.totalorder %s31, 0
      %p59 = por %p57, %p58
      %p60 = scmp.ne.s32.totalorder %s48, %s49
      %p61 = scmp.eq.s32.totalorder %s32, 1
      %p62 = por %p60, %p61
      %p64 = scmp.ne.s32.totalorder %s49, %s63
      %p65 = scmp.eq.s32.totalorder %s32, 0
      %p66 = por %p64, %p65
      %s67 = ssub.s32 %s33, %s45
      %s68 = ssub.s32 %s34, %s41
      %s69 = sor.u32 %s67, %s68
      %p70 = scmp.eq.s32.totalorder %s69, 0
      %s72 = sadd.s32 %s71, 1
      %s73 = scalar_select %p70, %s71, %s72
      %p76 = pneg %p70
      %p77 = scmp.eq.s32.totalorder %s26, 1
      %p78 = por %p76, %p77
      %p79 = scmp.ne.s32.totalorder %s71, %s74
      %p80 = scmp.eq.s32.totalorder %s26, 0
      %p81 = por %p79, %p80
      %p82 = scmp.ne.s32.totalorder %s71, %s74
      %p83 = scmp.eq.s32.totalorder %s31, 1
      %p84 = por %p82, %p83
      %p85 = scmp.ne.s32.totalorder %s74, %s75
      %p86 = scmp.eq.s32.totalorder %s31, 0
      %p87 = por %p85, %p86
      %p88 = scmp.ne.s32.totalorder %s74, %s75
      %p89 = scmp.eq.s32.totalorder %s32, 1
      %p90 = por %p88, %p89
      %p92 = scmp.ne.s32.totalorder %s75, %s91
      %p93 = scmp.eq.s32.totalorder %s32, 0
      %p94 = por %p92, %p93
      %s95 = sld [smem:[#allocation3 + %s33]]
      %s96 = sld [smem:[#allocation3 + %s45]]
      %s97 = ssub.s32 %s95, %s96
      %s98 = ssub.s32 %s34, %s41
      %s99 = sor.u32 %s97, %s98
      %p100 = scmp.eq.s32.totalorder %s99, 0
      %s102 = sadd.s32 %s101, 1
      %s103 = scalar_select %p100, %s101, %s102
      %p106 = pneg %p100
      %p107 = scmp.eq.s32.totalorder %s26, 1
      %p108 = por %p106, %p107
      %p109 = scmp.ne.s32.totalorder %s101, %s104
      %p110 = scmp.eq.s32.totalorder %s26, 0
      %p111 = por %p109, %p110
      %p112 = scmp.ne.s32.totalorder %s101, %s104
      %p113 = scmp.eq.s32.totalorder %s31, 1
      %p114 = por %p112, %p113
      %p115 = scmp.ne.s32.totalorder %s104, %s105
      %p116 = scmp.eq.s32.totalorder %s31, 0
      %p117 = por %p115, %p116
      %p118 = scmp.ne.s32.totalorder %s104, %s105
      %p119 = scmp.eq.s32.totalorder %s32, 1
      %p120 = por %p118, %p119
      %p122 = scmp.ne.s32.totalorder %s105, %s121
      %p123 = scmp.eq.s32.totalorder %s32, 0
      %p124 = por %p122, %p123
      %s125 = ssub.s32 %s33, %s45
      %s126 = ssub.s32 %s34, %s41
      %s127 = sor.u32 %s125, %s126
      %p128 = scmp.eq.s32.totalorder %s127, 0
      %s130 = sadd.s32 %s129, 1
      %s131 = scalar_select %p128, %s129, %s130
      %p134 = pneg %p128
      %p135 = scmp.eq.s32.totalorder %s26, 1
      %p136 = por %p134, %p135
      %p137 = scmp.ne.s32.totalorder %s129, %s132
      %p138 = scmp.eq.s32.totalorder %s26, 0
      %p139 = por %p137, %p138
      %p140 = scmp.ne.s32.totalorder %s129, %s132
      %p141 = scmp.eq.s32.totalorder %s31, 1
      %p142 = por %p140, %p141
      %p143 = scmp.ne.s32.totalorder %s132, %s133
      %p144 = scmp.eq.s32.totalorder %s31, 0
      %p145 = por %p143, %p144
      %p146 = scmp.ne.s32.totalorder %s132, %s133
      %p147 = scmp.eq.s32.totalorder %s32, 1
      %p148 = por %p146, %p147
      %p150 = scmp.ne.s32.totalorder %s133, %s149
      %p151 = scmp.eq.s32.totalorder %s32, 0
      %p152 = por %p150, %p151
      %p153 = scmp.le.s32.totalorder 1, %s26
      %p154 = scmp.lt.s32.totalorder %s26, 3
      %p155 = pnand %p153, %p154
      %p156 = pneg %p155
      // Predicated region
      $region9: #{tpu_custom_call.1} parent=5 // pred_check
        _
      $region10: #{tpu_custom_call.1} parent=5 // pred_check_branch
        %158 = sbr.rel (%p155) target = $region12
      $region11: #{tpu_custom_call.1} parent=5 // pred_region
        %s159 = ssub.s32 %s26, 1
        // Predicated region
        $region13: #{tpu_custom_call.1} parent=11 // pred_check
          %p160 = pneg %p59
        $region14: #{tpu_custom_call.1} parent=11 // pred_check_branch
          %162 = sbr.rel (%p160) target = $region16
        $region15: #{tpu_custom_call.1} parent=11 // pred_region
          _
        $region16: #{tpu_custom_call.1} parent=11 // pred_fallthru
          _
      $region12: #{tpu_custom_call.1} parent=5 // pred_fallthru
        _
      %p163 = scmp.lt.s32.totalorder %s26, 2
      // Predicated region
      $region17: #{tpu_custom_call.1} parent=5 // pred_check
        %p164 = pneg %p163
      $region18: #{tpu_custom_call.1} parent=5 // pred_check_branch
        %166 = sbr.rel (%p164) target = $region20
      $region19: #{tpu_custom_call.1} parent=5 // pred_region
        // Predicated region
        $region21: #{tpu_custom_call.1} parent=19 // pred_check
          %p167 = pneg %p81
        $region22: #{tpu_custom_call.1} parent=19 // pred_check_branch
          %169 = sbr.rel (%p167) target = $region24
        $region23: #{tpu_custom_call.1} parent=19 // pred_region
          %s170 = sand.u32 %s71, 1
          %s171 = scalar_lea.sflag [#allocation6], %s170
          %s172 = sand.u32 %s71, 1
          %s173 = smul.addr %s172, 8
          %s174 = scalar_lea.vmem [#allocation5], %s173
          %s176 = ssub.s32 128, 128
          %177 = vsyncadd %s171, %s176
          %s178 = sadd.s32 %s34, %s33
          %s179 = smul.addr %s178, 128
          %s180 = scalar_lea.hbm %s2, %s179
          %s182 = sshll.u32 %s174, 4
          %s183 = int_to_ptr.vmem [resolvable:$true] %s182
          %185 = dma.hbm_to_vmem [thread:$0]  %s180, 128, %s183, %s171
        $region24: #{tpu_custom_call.1} parent=19 // pred_fallthru
          _
        // Predicated region
        $region25: #{tpu_custom_call.1} parent=19 // pred_check
          %p186 = pneg %p111
        $region26: #{tpu_custom_call.1} parent=19 // pred_check_branch
          %188 = sbr.rel (%p186) target = $region28
        $region27: #{tpu_custom_call.1} parent=19 // pred_region
          %s189 = sand.u32 %s101, 1
          %s190 = scalar_lea.sflag [#allocation9], %s189
          %s191 = sand.u32 %s101, 1
          %s192 = smul.addr %s191, 8
          %s193 = scalar_lea.vmem [#allocation8], %s192
          %s194 = sld [smem:[#allocation3 + %s33]]
          %s196 = ssub.s32 128, 128
          %197 = vsyncadd %s190, %s196
          %s198 = sadd.s32 %s34, %s194
          %s199 = smul.addr %s198, 128
          %s200 = scalar_lea.hbm %s3, %s199
          %s202 = sshll.u32 %s193, 4
          %s203 = int_to_ptr.vmem [resolvable:$true] %s202
          %205 = dma.hbm_to_vmem [thread:$0]  %s200, 128, %s203, %s190
        $region28: #{tpu_custom_call.1} parent=19 // pred_fallthru
          _
      $region20: #{tpu_custom_call.1} parent=5 // pred_fallthru
        _
      %p206 = scmp.le.s32.totalorder 1, %s26
      %p207 = scmp.lt.s32.totalorder %s26, 3
      %p208 = pnand %p206, %p207
      %p209 = pneg %p208
      // Predicated region
      $region29: #{tpu_custom_call.1} parent=5 // pred_check
        _
      $region30: #{tpu_custom_call.1} parent=5 // pred_check_branch
        %211 = sbr.rel (%p208) target = $region32
      $region31: #{tpu_custom_call.1} parent=5 // pred_region
        %s212 = ssub.s32 %s26, 1
        %s213 = sand.u32 %s74, 1
        %s214 = scalar_lea.sflag [#allocation6], %s213
        %s215 = sand.u32 %s74, 1
        %s216 = smul.addr %s215, 8
        %s217 = scalar_lea.vmem [#allocation5], %s216
        // Predicated region
        $region33: #{tpu_custom_call.1} parent=31 // pred_check
          %p218 = pneg %p87
        $region34: #{tpu_custom_call.1} parent=31 // pred_check_branch
          %220 = sbr.rel (%p218) target = $region36
        $region35: #{tpu_custom_call.1} parent=31 // pred_region
          %221 = dma.done %s214, 128
        $region36: #{tpu_custom_call.1} parent=31 // pred_fallthru
          _
        %s222 = sand.u32 %s104, 1
        %s223 = scalar_lea.sflag [#allocation9], %s222
        %s224 = sand.u32 %s104, 1
        %s225 = smul.addr %s224, 8
        %s226 = scalar_lea.vmem [#allocation8], %s225
        // Predicated region
        $region37: #{tpu_custom_call.1} parent=31 // pred_check
          %p227 = pneg %p117
        $region38: #{tpu_custom_call.1} parent=31 // pred_check_branch
          %229 = sbr.rel (%p227) target = $region40
        $region39: #{tpu_custom_call.1} parent=31 // pred_region
          %230 = dma.done %s223, 128
        $region40: #{tpu_custom_call.1} parent=31 // pred_fallthru
          _
        %p231 = pneg %p59
        %p232 = pneg %p56
        %s233 = sand.u32 %s74, 1
        %s234 = scalar_lea.sflag [#allocation6], %s233
        %s235 = sand.u32 %s74, 1
        %s236 = smul.addr %s235, 8
        %s237 = scalar_lea.vmem [#allocation5], %s236
        %p238 = pneg %p87
        %p239 = pneg %p84
        %s240 = sand.u32 %s104, 1
        %s241 = scalar_lea.sflag [#allocation9], %s240
        %s242 = sand.u32 %s104, 1
        %s243 = smul.addr %s242, 8
        %s244 = scalar_lea.vmem [#allocation8], %s243
        %p245 = pneg %p117
        %p246 = pneg %p114
        %p247 = pneg %p145
        %p248 = pneg %p142
        %s249 = sand.u32 %s132, 1
        %s250 = scalar_lea.sflag [#allocation7], %s249
        %s251 = sand.u32 %s132, 1
        %s252 = smul.addr %s251, 8
        %s253 = scalar_lea.vmem [#allocation10], %s252
        %s254 = sld [smem:[#allocation3 + %s35]]
        %s255 = sld [smem:[#allocation4]]
        %v256 = vld [vmem:[%s217] sm:$0xff]
        %v257 = vld [vmem:[%s226] sm:$0xff]
        %v258 = vsub.f32 %v256, %v257
        %v259 = vstv %s255
        %v260 = vmul.f32 %v259, %v258
        %v261 = vadd.f32 %v257, %v260
        %262 = vst [vmem:[%s253] sm:$0xff] %v261
        %s263 = sand.u32 %s132, 1
        %s264 = scalar_lea.sflag [#allocation7], %s263
        %s265 = sand.u32 %s132, 1
        %s266 = smul.addr %s265, 8
        %s267 = scalar_lea.vmem [#allocation10], %s266
        // Predicated region
        $region41: #{tpu_custom_call.1} parent=31 // pred_check
          %p268 = pneg %p142
        $region42: #{tpu_custom_call.1} parent=31 // pred_check_branch
          %270 = sbr.rel (%p268) target = $region44
        $region43: #{tpu_custom_call.1} parent=31 // pred_region
          %s272 = ssub.s32 128, 128
          %273 = vsyncadd %s264, %s272
          %s274 = sadd.s32 %s36, %s35
          %s275 = smul.addr %s274, 128
          %s276 = scalar_lea.hbm %s4, %s275
          %s278 = sshll.u32 %s267, 4
          %s279 = int_to_ptr.vmem [resolvable:$true] %s278
          %281 = dma.vmem_to_hbm [thread:$0]  %s279, 128, %s276, %s264
        $region44: #{tpu_custom_call.1} parent=31 // pred_fallthru
          _
      $region32: #{tpu_custom_call.1} parent=5 // pred_fallthru
        _
      %p282 = scmp.le.s32.totalorder 2, %s26
      // Predicated region
      $region45: #{tpu_custom_call.1} parent=5 // pred_check
        %p283 = pneg %p282
      $region46: #{tpu_custom_call.1} parent=5 // pred_check_branch
        %285 = sbr.rel (%p283) target = $region48
      $region47: #{tpu_custom_call.1} parent=5 // pred_region
        %s286 = ssub.s32 %s26, 2
        // Predicated region
        $region49: #{tpu_custom_call.1} parent=47 // pred_check
          %p287 = pneg %p148
        $region50: #{tpu_custom_call.1} parent=47 // pred_check_branch
          %289 = sbr.rel (%p287) target = $region52
        $region51: #{tpu_custom_call.1} parent=47 // pred_region
          %s290 = sand.u32 %s133, 1
          %s291 = scalar_lea.sflag [#allocation7], %s290
          %s292 = sand.u32 %s133, 1
          %s293 = smul.addr %s292, 8
          %s294 = scalar_lea.vmem [#allocation10], %s293
          %295 = dma.done %s291, 128
        $region52: #{tpu_custom_call.1} parent=47 // pred_fallthru
          _
      $region48: #{tpu_custom_call.1} parent=5 // pred_fallthru
        _
    $region6: #{tpu_custom_call.1} parent=1 // loop_footer
      %s30 = sadd.s32 1, %s26
    $region7: #{tpu_custom_call.1} parent=1 // loop_footer_branch
      %25 = sbr.rel target = $region3
    $region8: #{tpu_custom_call.1} parent=1 // loop_exit
      _
    %296 = vsyncpa [#allocation6], 1
    %s297 = scalar_lea.sflag [#allocation6], 1
    %298 = vsyncpa %s297, 1
    %299 = vsyncpa [#allocation9], 1
    %s300 = scalar_lea.sflag [#allocation9], 1
    %301 = vsyncpa %s300, 1
    %302 = vsyncpa [#allocation7], 1
    %s303 = scalar_lea.sflag [#allocation7], 1
    %304 = vsyncpa %s303, 1

</llo_original>
